<compile_context>
chip_gen: v5e
topology: v5e:2x2
jax: 0.10.0
libtpu: 0.0.40
codegen_flags: <defaults>
</compile_context>

<pallas_src>
import functools

import jax
import jax.numpy as jnp
from jax.experimental import pallas as pl
from jax.experimental.pallas import tpu as pltpu


def _attention_mask_kernel(x_ref, o_ref, *, scale):
    # x_ref / o_ref: (TR, H*W) tile in VMEM.  Each row is one (b, c) channel.
    x = x_ref[...]
    # Per-row spatial sum, accumulated in f32 regardless of input dtype.
    row_sum = jnp.sum(x.astype(jnp.float32), axis=-1, keepdims=True)  # (TR, 1)
    # One reciprocal per row (EUP path), exact to keep 1e-5 tolerance.
    inv = jnp.float32(scale) * pl.reciprocal(row_sum, approx=False)    # (TR, 1)
    if jnp.dtype(x_ref.dtype) == jnp.float32:
        out = x * inv                      # f32 broadcast multiply
    else:
        out = x * inv.astype(x_ref.dtype)  # keep multiply in native (e.g. bf16)
    o_ref[...] = out.astype(o_ref.dtype)


def attention_mask(x: jax.Array) -> jax.Array:
    """x: (B, C, H, W) float array. Returns same shape/dtype."""
    B, C, H, W = x.shape
    rows, cols = B * C, H * W
    x2 = x.reshape(rows, cols)  # row-major NCHW -> free reshape

    # Row-tile size: multiple of 8, target 512, capped so one buffer <= ~2 MiB
    # (double-buffered in + out => <= ~8 MiB total, under every chip's scoped
    # VMEM default).
    itemsize = jnp.dtype(x.dtype).itemsize
    max_tr_by_vmem = max(8, (2 * 1024 * 1024) // max(1, cols * itemsize))
    padded_rows = ((rows + 7) // 8) * 8
    tr = min(512, max_tr_by_vmem, padded_rows)
    tr = max(8, (tr // 8) * 8)

    scale = float(H) * float(W) * 0.5
    kernel = functools.partial(_attention_mask_kernel, scale=scale)

    out2 = pl.pallas_call(
        kernel,
        out_shape=jax.ShapeDtypeStruct((rows, cols), x.dtype),
        grid_spec=pl.GridSpec(
            grid=(pl.cdiv(rows, tr),),
            in_specs=[pl.BlockSpec((tr, cols), lambda i: (i, 0))],
            out_specs=pl.BlockSpec((tr, cols), lambda i: (i, 0)),
        ),
        compiler_params=pltpu.CompilerParams(
            dimension_semantics=("parallel",),
        ),
    )(x2)
    return out2.reshape(B, C, H, W)


def attention_mask_ref(x: jax.Array) -> jax.Array:
    """Pure-JAX reference mirroring the PyTorch forward."""
    xsum = jnp.sum(x, axis=2, keepdims=True)
    xsum = jnp.sum(xsum, axis=3, keepdims=True)
    H, W = x.shape[2], x.shape[3]
    return x / xsum * H * W * 0.5


if __name__ == "__main__":
    key = jax.random.PRNGKey(0)
    # Small NCHW input consistent with the module: batch=2, channels=4, spatial=16x16.
    x = jax.random.uniform(key, (2, 4, 16, 16), dtype=jnp.float32) + 0.1

    out = attention_mask(x)
    out = jax.block_until_ready(out)

    ref = attention_mask_ref(x)
    assert out.shape == ref.shape and out.dtype == ref.dtype
    assert jnp.allclose(out, ref, rtol=1e-5, atol=1e-5), "mismatch vs reference"

    print("KERNEL_OK")
</pallas_src>

<mosaic_0001>
module attributes {stable_mosaic.version = 11 : i64} {
  func.func @_attention_mask_kernel(%arg0: i32, %arg1: memref<8x256xf32, #tpu.memory_space<vmem>>, %arg2: memref<8x256xf32, #tpu.memory_space<vmem>>) attributes {dimension_semantics = [#tpu.dimension_semantics<parallel>], iteration_bounds = array<i64: 1>, scalar_prefetch = 0 : i64, scratch_operands = 0 : i64, tpu.core_type = #tpu.core_type<tc>, window_params = [{transform_indices = @transform_0, window_bounds = array<i64: 8, 256>}, {transform_indices = @transform_1, window_bounds = array<i64: 8, 256>}]} {
    %c0 = arith.constant 0 : index
    %c0_0 = arith.constant 0 : index
    %0 = vector.load %arg1[%c0, %c0_0] : memref<8x256xf32, #tpu.memory_space<vmem>>, vector<8x256xf32>
    %cst = arith.constant dense<0.000000e+00> : vector<8xf32>
    %1 = vector.multi_reduction <add>, %0, %cst [1] : vector<8x256xf32> to vector<8xf32>
    %2 = vector.shape_cast %1 : vector<8xf32> to vector<8x1xf32>
    %3 = tpu.reciprocal %2 : vector<8x1xf32> -> vector<8x1xf32>
    %cst_1 = arith.constant 1.280000e+02 : f32
    %4 = vector.broadcast %cst_1 : f32 to vector<8x1xf32>
    %5 = arith.mulf %4, %3 : vector<8x1xf32>
    %6 = vector.broadcast %5 : vector<8x1xf32> to vector<8x256xf32>
    %7 = arith.mulf %0, %6 : vector<8x256xf32>
    %c0_2 = arith.constant 0 : index
    %c0_3 = arith.constant 0 : index
    %8 = vector.load %arg2[%c0_2, %c0_3] : memref<8x256xf32, #tpu.memory_space<vmem>>, vector<8x256xf32>
    tpu.vector_store %arg2[%c0_2, %c0_3], %7 {strides = array<i32>} : memref<8x256xf32, #tpu.memory_space<vmem>>, vector<8x256xf32>,
    return
  }
  func.func @transform_0(%arg0: i32) -> (i32, i32) {
    %c0_i32 = arith.constant 0 : i32
    %c0_i32_0 = arith.constant 0 : i32
    return %arg0, %c0_i32 : i32, i32
  }
  func.func @transform_1(%arg0: i32) -> (i32, i32) {
    %c0_i32 = arith.constant 0 : i32
    %c0_i32_0 = arith.constant 0 : i32
    return %arg0, %c0_i32 : i32, i32
  }
}

</mosaic_0001>

<llo_original>
// kernel: tpu_custom_call.1
$region0: #{tpu_custom_call.1}
  #allocation0 [shape = 'u32[]', space=smem, size = 0x4, offset = 0x4, fixed_abs, tag = 'smem constant byte address 0x4 - core index']
  #allocation1 [shape = 'u32[72,128]{1,0:T(1,128)}', space=vmem, size = 0x9000, scoped, tag = 'internal scratch']
  %s0 = inlined_call_operand.hbm [shape: f32[8,256], index: 0, kind: input, shape index: {}]
  %s1 = inlined_call_operand.hbm [shape: f32[8,256], index: 1, kind: output, shape index: {}]
  %s2 = sld [smem:[#allocation0]]
  $region18: #{tpu_custom_call.1} parent=0
    _
  %s4 = ssub.s32 1, %s2
  %s5 = scalar_select 0, %s4, %s2
  $region1: #{tpu_custom_call.1} parent=0
    #allocation2 [shape = 'u8[8192]{0}', space=vmem, size = 0x2000, scoped, tag = 'input window, operand 0, single buffered']
    #allocation3 [shape = 's32[1]{0}', space=sflag, size = 0x4, scoped, tag = 'scoped memory for tpu_custom_call.1']
    #allocation4 [shape = 's32[1]{0}', space=sflag, size = 0x4, scoped, tag = 'scoped memory for tpu_custom_call.1']
    #allocation5 [shape = 'u8[8192]{0}', space=vmem, size = 0x2000, scoped, tag = 'output window, operand 0, single buffered']
    %6 = vsyncpa [#allocation3], 0
    %7 = vsyncpa [#allocation4], 0
    // Predicated region
    $region2: #{tpu_custom_call.1} parent=1 // pred_check
      _
    $region3: #{tpu_custom_call.1} parent=1 // pred_check_branch
      %9 = sbr.rel (0) target = $region5
    $region4: #{tpu_custom_call.1} parent=1 // pred_region
      %11 = vsyncadd [#allocation3], 0
      %s13 = sshll.u32 %s0, 4
      %s14 = int_to_ptr.hbm [resolvable:$true] %s13
      %s15 = sshll.u32 [#allocation2], 4
      %s16 = int_to_ptr.vmem [resolvable:$true] %s15
      %18 = dma.hbm_to_vmem [thread:$0]  %s14, 256, %s16, [#allocation3]
    $region5: #{tpu_custom_call.1} parent=1 // pred_fallthru
      _
    // Predicated region
    $region6: #{tpu_custom_call.1} parent=1 // pred_check
      _
    $region7: #{tpu_custom_call.1} parent=1 // pred_check_branch
      %20 = sbr.rel (0) target = $region9
    $region8: #{tpu_custom_call.1} parent=1 // pred_region
      %22 = dma.done [#allocation3], 256
    $region9: #{tpu_custom_call.1} parent=1 // pred_fallthru
      _
    %v23 = vld [vmem:[#allocation2] sm:$0xff]
    %v24 = vld [vmem:[#allocation2 + $0x8] sm:$0xff]
    %v25 = vadd.f32 %v23, %v24
    %26 = vadd.xlane.f32.xlu0 %v25
    %v27 = vpop.xlane.xlu0 %26
    %v28 = vrcp.pop %v27
    %v29 = vmul.f32 %v27, %v28
    %v30 = vsub.f32 1.0, %v29
    %v31 = vmul.f32 %v28, %v30
    %v32 = vadd.f32 %v28, %v31
    %vm33 = vweird.f32 %v27
    %vm34 = vweird.f32 %v28
    %vm35 = vmor %vm33, %vm34
    %v36 = vsel %vm35, %v28, %v32
    %v37 = vand.u32 2147483647, %v27
    %vm38 = vcmp.eq.f32.partialorder %v37, 8.507059e+37
    %v39 = vand.u32 %v27, 2147483648
    %v40 = vor.u32 1.1754944e-38, %v39
    %v41 = vsel %vm38, %v40, %v36
    %v42 = vmul.f32 %v41, 128.0
    %v43 = vmul.f32 %v23, %v42
    %v44 = vmul.f32 %v24, %v42
    %45 = vst [vmem:[#allocation5] sm:$0xff] %v43
    %46 = vst [vmem:[#allocation5 + $0x8] sm:$0xff] %v44
    // Predicated region
    $region10: #{tpu_custom_call.1} parent=1 // pred_check
      _
    $region11: #{tpu_custom_call.1} parent=1 // pred_check_branch
      %48 = sbr.rel (0) target = $region13
    $region12: #{tpu_custom_call.1} parent=1 // pred_region
      %50 = vsyncadd [#allocation4], 0
      %s52 = sshll.u32 [#allocation5], 4
      %s53 = int_to_ptr.vmem [resolvable:$true] %s52
      %s54 = sshll.u32 %s1, 4
      %s55 = int_to_ptr.hbm [resolvable:$true] %s54
      %57 = dma.vmem_to_hbm [thread:$0]  %s53, 256, %s55, [#allocation4]
    $region13: #{tpu_custom_call.1} parent=1 // pred_fallthru
      _
    // Predicated region
    $region14: #{tpu_custom_call.1} parent=1 // pred_check
      _
    $region15: #{tpu_custom_call.1} parent=1 // pred_check_branch
      %59 = sbr.rel (0) target = $region17
    $region16: #{tpu_custom_call.1} parent=1 // pred_region
      %61 = dma.done [#allocation4], 256
    $region17: #{tpu_custom_call.1} parent=1 // pred_fallthru
      _
    %62 = vsyncpa [#allocation3], 1
    %63 = vsyncpa [#allocation4], 1

</llo_original>
